<compile_context>
chip_gen: v5e
topology: v5e:2x2
jax: 0.10.0
libtpu: 0.0.40
codegen_flags: <defaults>
</compile_context>

<pallas_src>
import functools

import jax
import jax.numpy as jnp
from jax.experimental import pallas as pl
from jax.experimental.pallas import tpu as pltpu

INPUT_SIZE = 784
HIDDEN_SIZE = 128
OUTPUT_SIZE = 10
PADDED_OUTPUT = 128          # lane-dense output slab (multiple of 128)
DEFAULT_TB = 4096            # batch rows per grid step
SUBLANE = 16                 # covers f32 (8) and bf16 (16) sublane tiling


def _round_up(n, m):
    return ((n + m - 1) // m) * m


def mlp_kernel(x_ref, w1_ref, b1_ref, w2_ref, b2_ref, o_ref):
    # In-kernel f32 -> bf16 cast of the streamed x tile (no wrapper-side pass).
    x = x_ref[...].astype(jnp.bfloat16)
    # fc1: [TB,784]bf16 @ [784,128]bf16 -> f32 accumulate; bias + ReLU in f32.
    h = jnp.dot(x, w1_ref[...], preferred_element_type=jnp.float32)
    h = jnp.maximum(h + b1_ref[...], 0.0)
    # fc2 into a 128-wide lane-dense slab (cols 10..127 of w2/b2 are zero).
    out = jnp.dot(h.astype(jnp.bfloat16), w2_ref[...],
                  preferred_element_type=jnp.float32)
    # bf16 writeback (accumulation stayed f32).
    o_ref[...] = (out + b2_ref[...]).astype(o_ref.dtype)


@functools.partial(jax.jit, static_argnames=("block_b",))
def mlp_forward_padded(x, w1, b1, w2, b2, *, block_b=DEFAULT_TB):
    """x: [B, 784]; w1: [784,128]; b1: [1,128]; w2: [128,10]; b2: [1,10].
    Returns the padded logits slab [B_pad, 128] bf16 (real logits in [:, :10])."""
    B = x.shape[0]

    # ---- wrapper-side prep (weights only; all tiny) ----
    w1b = w1.astype(jnp.bfloat16)
    b1f = b1.astype(jnp.float32).reshape(1, HIDDEN_SIZE)
    w2p = jnp.zeros((HIDDEN_SIZE, PADDED_OUTPUT), jnp.bfloat16)
    w2p = w2p.at[:, :OUTPUT_SIZE].set(w2.astype(jnp.bfloat16))
    b2p = jnp.zeros((1, PADDED_OUTPUT), jnp.float32)
    b2p = b2p.at[:, :OUTPUT_SIZE].set(
        b2.astype(jnp.float32).reshape(1, OUTPUT_SIZE))

    # x stays f32 (cast happens in-kernel). Pad batch only to the sublane
    # multiple; the grid handles ragged last tiles via pl.cdiv.
    x = x.astype(jnp.float32)
    b_pad = _round_up(B, SUBLANE)
    if b_pad != B:
        x = jnp.pad(x, ((0, b_pad - B), (0, 0)))

    # Batch tile: multiple of 16, capped so the grid keeps >= 2 steps when the
    # batch is large enough (megacore sharding on v7x's two TensorCores).
    tb = min(block_b, max(SUBLANE, _round_up(pl.cdiv(b_pad, 2), SUBLANE)))
    tb = min(tb, b_pad)
    grid = (pl.cdiv(b_pad, tb),)

    flops = 2 * b_pad * INPUT_SIZE * HIDDEN_SIZE \
        + 2 * b_pad * HIDDEN_SIZE * PADDED_OUTPUT
    bytes_accessed = (b_pad * INPUT_SIZE * 4          # x (f32 read)
                      + w1b.size * 2 + w2p.size * 2   # weights (bf16)
                      + b1f.size * 4 + b2p.size * 4   # biases (f32)
                      + b_pad * PADDED_OUTPUT * 2)    # output (bf16 write)

    out = pl.pallas_call(
        mlp_kernel,
        out_shape=jax.ShapeDtypeStruct((b_pad, PADDED_OUTPUT), jnp.bfloat16),
        grid_spec=pl.GridSpec(
            grid=grid,
            in_specs=[
                # x streams through, one TB-row tile per grid step.
                pl.BlockSpec((tb, INPUT_SIZE), lambda i: (i, 0)),
                # Weights / biases: same block every step -> resident in VMEM.
                pl.BlockSpec((INPUT_SIZE, HIDDEN_SIZE), lambda i: (0, 0)),
                pl.BlockSpec((1, HIDDEN_SIZE), lambda i: (0, 0)),
                pl.BlockSpec((HIDDEN_SIZE, PADDED_OUTPUT), lambda i: (0, 0)),
                pl.BlockSpec((1, PADDED_OUTPUT), lambda i: (0, 0)),
            ],
            out_specs=pl.BlockSpec((tb, PADDED_OUTPUT), lambda i: (i, 0)),
        ),
        compiler_params=pltpu.CompilerParams(
            dimension_semantics=("parallel",),      # megacore-shard batch (v7x)
            vmem_limit_bytes=48 * 1024 * 1024,      # fits v7x 64 MiB w/ headroom
        ),
        cost_estimate=pl.CostEstimate(
            flops=flops, transcendentals=0, bytes_accessed=bytes_accessed),
    )(x, w1b, b1f, w2p, b2p)

    return out


def mlp_forward(x, w1, b1, w2, b2, *, block_b=DEFAULT_TB):
    """Module-compatible API: returns logits [B, 10] f32.
    NOTE: the slice/cast here is an extra (small) pass; perf-sensitive callers
    should consume mlp_forward_padded(...)[:, :OUTPUT_SIZE] directly (e.g. feed
    it to a fused softmax/argmax)."""
    out = mlp_forward_padded(x, w1, b1, w2, b2, block_b=block_b)
    return out[:x.shape[0], :OUTPUT_SIZE].astype(jnp.float32)


def init_params(key):
    """Deterministic init mimicking nn.Linear's uniform(-1/sqrt(fan_in), +1/sqrt(fan_in)).
    Weights stored in [in, out] layout (transpose of PyTorch's [out, in])."""
    k1, k2, k3, k4 = jax.random.split(key, 4)
    bound1 = 1.0 / jnp.sqrt(jnp.float32(INPUT_SIZE))
    bound2 = 1.0 / jnp.sqrt(jnp.float32(HIDDEN_SIZE))
    w1 = jax.random.uniform(k1, (INPUT_SIZE, HIDDEN_SIZE), jnp.float32, -bound1, bound1)
    b1 = jax.random.uniform(k2, (1, HIDDEN_SIZE), jnp.float32, -bound1, bound1)
    w2 = jax.random.uniform(k3, (HIDDEN_SIZE, OUTPUT_SIZE), jnp.float32, -bound2, bound2)
    b2 = jax.random.uniform(k4, (1, OUTPUT_SIZE), jnp.float32, -bound2, bound2)
    return w1, b1, w2, b2


if __name__ == "__main__":
    key = jax.random.PRNGKey(0)
    k_params, k_x = jax.random.split(key)
    w1, b1, w2, b2 = init_params(k_params)

    B = 8  # small batch
    x = jax.random.normal(k_x, (B, INPUT_SIZE), jnp.float32)

    out = mlp_forward(x, w1, b1, w2, b2)
    out = jax.block_until_ready(out)

    # Reference in plain JAX, mirroring the kernel's bf16 input/weight casts,
    # f32 accumulation, and bf16 output writeback.
    xb = x.astype(jnp.bfloat16).astype(jnp.float32)
    w1b = w1.astype(jnp.bfloat16).astype(jnp.float32)
    w2b = w2.astype(jnp.bfloat16).astype(jnp.float32)
    hp = jax.lax.Precision.HIGHEST
    h_ref = jnp.maximum(jnp.dot(xb, w1b, precision=hp) + b1, 0.0)
    ref = jnp.dot(h_ref.astype(jnp.bfloat16).astype(jnp.float32), w2b,
                  precision=hp) + b2
    ref = ref.astype(jnp.bfloat16).astype(jnp.float32)

    assert out.shape == (B, OUTPUT_SIZE)
    assert jnp.allclose(out, ref, atol=2e-2, rtol=2e-2), (
        float(jnp.max(jnp.abs(out - ref))))

    print("KERNEL_OK")
</pallas_src>

<mosaic_0001>
module attributes {stable_mosaic.version = 11 : i64} {
  func.func @mlp_kernel(%arg0: i32, %arg1: memref<16x784xf32, #tpu.memory_space<vmem>>, %arg2: memref<784x128xbf16, #tpu.memory_space<vmem>>, %arg3: memref<1x128xf32, #tpu.memory_space<vmem>>, %arg4: memref<128x128xbf16, #tpu.memory_space<vmem>>, %arg5: memref<1x128xf32, #tpu.memory_space<vmem>>, %arg6: memref<16x128xbf16, #tpu.memory_space<vmem>>) attributes {dimension_semantics = [#tpu.dimension_semantics<parallel>], iteration_bounds = array<i64: 1>, scalar_prefetch = 0 : i64, scratch_operands = 0 : i64, tpu.core_type = #tpu.core_type<tc>, window_params = [{transform_indices = @transform_0, window_bounds = array<i64: 16, 784>}, {pipeline_mode = #tpu.pipeline_mode<synchronous>, transform_indices = @transform_1, window_bounds = array<i64: 784, 128>}, {pipeline_mode = #tpu.pipeline_mode<synchronous>, transform_indices = @transform_2, window_bounds = array<i64: 1, 128>}, {pipeline_mode = #tpu.pipeline_mode<synchronous>, transform_indices = @transform_3, window_bounds = array<i64: 128, 128>}, {pipeline_mode = #tpu.pipeline_mode<synchronous>, transform_indices = @transform_4, window_bounds = array<i64: 1, 128>}, {transform_indices = @transform_5, window_bounds = array<i64: 16, 128>}]} {
    %c0 = arith.constant 0 : index
    %c0_0 = arith.constant 0 : index
    %0 = vector.load %arg1[%c0, %c0_0] : memref<16x784xf32, #tpu.memory_space<vmem>>, vector<16x784xf32>
    %1 = arith.truncf %0 : vector<16x784xf32> to vector<16x784xbf16>
    %c0_1 = arith.constant 0 : index
    %c0_2 = arith.constant 0 : index
    %2 = vector.load %arg2[%c0_1, %c0_2] : memref<784x128xbf16, #tpu.memory_space<vmem>>, vector<784x128xbf16>
    %cst = arith.constant dense<0.000000e+00> : vector<16x128xf32>
    %3 = tpu.matmul %1, %2, %cst {dimension_numbers = #tpu.dot_dimension_numbers<[1], [0], [0], [1], [0, 0, 1, 1], [], []>} : vector<16x784xbf16>, vector<784x128xbf16>, vector<16x128xf32> -> vector<16x128xf32>
    %c0_3 = arith.constant 0 : index
    %c0_4 = arith.constant 0 : index
    %4 = vector.load %arg3[%c0_3, %c0_4] : memref<1x128xf32, #tpu.memory_space<vmem>>, vector<1x128xf32>
    %5 = vector.broadcast %4 : vector<1x128xf32> to vector<16x128xf32>
    %6 = arith.addf %3, %5 : vector<16x128xf32>
    %cst_5 = arith.constant 0.000000e+00 : f32
    %7 = vector.broadcast %cst_5 : f32 to vector<16x128xf32>
    %8 = arith.maximumf %6, %7 : vector<16x128xf32>
    %9 = arith.truncf %8 : vector<16x128xf32> to vector<16x128xbf16>
    %c0_6 = arith.constant 0 : index
    %c0_7 = arith.constant 0 : index
    %10 = vector.load %arg4[%c0_6, %c0_7] : memref<128x128xbf16, #tpu.memory_space<vmem>>, vector<128x128xbf16>
    %cst_8 = arith.constant dense<0.000000e+00> : vector<16x128xf32>
    %11 = tpu.matmul %9, %10, %cst_8 {dimension_numbers = #tpu.dot_dimension_numbers<[1], [0], [0], [1], [0, 0, 1, 1], [], []>} : vector<16x128xbf16>, vector<128x128xbf16>, vector<16x128xf32> -> vector<16x128xf32>
    %c0_9 = arith.constant 0 : index
    %c0_10 = arith.constant 0 : index
    %12 = vector.load %arg5[%c0_9, %c0_10] : memref<1x128xf32, #tpu.memory_space<vmem>>, vector<1x128xf32>
    %13 = vector.broadcast %12 : vector<1x128xf32> to vector<16x128xf32>
    %14 = arith.addf %11, %13 : vector<16x128xf32>
    %15 = arith.truncf %14 : vector<16x128xf32> to vector<16x128xbf16>
    %c0_11 = arith.constant 0 : index
    %c0_12 = arith.constant 0 : index
    %16 = vector.load %arg6[%c0_11, %c0_12] : memref<16x128xbf16, #tpu.memory_space<vmem>>, vector<16x128xbf16>
    tpu.vector_store %arg6[%c0_11, %c0_12], %15 {strides = array<i32>} : memref<16x128xbf16, #tpu.memory_space<vmem>>, vector<16x128xbf16>,
    return
  }
  func.func @transform_0(%arg0: i32) -> (i32, i32) {
    %c0_i32 = arith.constant 0 : i32
    %c0_i32_0 = arith.constant 0 : i32
    return %arg0, %c0_i32 : i32, i32
  }
  func.func @transform_1(%arg0: i32) -> (i32, i32) {
    %c0_i32 = arith.constant 0 : i32
    %c0_i32_0 = arith.constant 0 : i32
    %c0_i32_1 = arith.constant 0 : i32
    return %c0_i32, %c0_i32_0 : i32, i32
  }
  func.func @transform_2(%arg0: i32) -> (i32, i32) {
    %c0_i32 = arith.constant 0 : i32
    %c0_i32_0 = arith.constant 0 : i32
    %c0_i32_1 = arith.constant 0 : i32
    return %c0_i32, %c0_i32_0 : i32, i32
  }
  func.func @transform_3(%arg0: i32) -> (i32, i32) {
    %c0_i32 = arith.constant 0 : i32
    %c0_i32_0 = arith.constant 0 : i32
    %c0_i32_1 = arith.constant 0 : i32
    return %c0_i32, %c0_i32_0 : i32, i32
  }
  func.func @transform_4(%arg0: i32) -> (i32, i32) {
    %c0_i32 = arith.constant 0 : i32
    %c0_i32_0 = arith.constant 0 : i32
    %c0_i32_1 = arith.constant 0 : i32
    return %c0_i32, %c0_i32_0 : i32, i32
  }
  func.func @transform_5(%arg0: i32) -> (i32, i32) {
    %c0_i32 = arith.constant 0 : i32
    %c0_i32_0 = arith.constant 0 : i32
    return %arg0, %c0_i32 : i32, i32
  }
}

</mosaic_0001>

<llo_original>
// kernel: mlp_forward_padded.1
$region0: #{mlp_forward_padded.1}
  #allocation0 [shape = 'u32[]', space=smem, size = 0x4, offset = 0x4, fixed_abs, tag = 'smem constant byte address 0x4 - core index']
  #allocation1 [shape = 'u32[72,128]{1,0:T(1,128)}', space=vmem, size = 0x9000, scoped, tag = 'internal scratch']
  %s0 = inlined_call_operand.vmem [shape: f32[16,784], index: 0, kind: input, shape index: {}]
  %s1 = inlined_call_operand.vmem [shape: bf16[784,128], index: 1, kind: input, shape index: {}]
  %s2 = inlined_call_operand.vmem [shape: f32[1,128], index: 2, kind: input, shape index: {}]
  %s3 = inlined_call_operand.vmem [shape: bf16[128,128], index: 3, kind: input, shape index: {}]
  %s4 = inlined_call_operand.vmem [shape: f32[1,128], index: 4, kind: input, shape index: {}]
  %s5 = inlined_call_operand.hbm [shape: bf16[16,128], index: 5, kind: output, shape index: {}]
  %s6 = sld [smem:[#allocation0]]
  $region30: #{mlp_forward_padded.1} parent=0
    _
  %s8 = ssub.s32 1, %s6
  %s9 = scalar_select 0, %s8, %s6
  $region1: #{mlp_forward_padded.1} parent=0
    #allocation2 [shape = 'u8[4096]{0}', space=vmem, size = 0x1000, scoped, tag = 'output window, operand 0, single buffered']
    #allocation3 [shape = 's32[1]{0}', space=sflag, size = 0x4, scoped, tag = 'scoped memory for mlp_forward_padded.1']
    %10 = vsyncpa [#allocation3], 0
    // Predicated region
    $region2: #{mlp_forward_padded.1} parent=1 // pred_check
      _
    $region3: #{mlp_forward_padded.1} parent=1 // pred_check_branch
      %12 = sbr.rel (0) target = $region5
    $region4: #{mlp_forward_padded.1} parent=1 // pred_region
      _
    $region5: #{mlp_forward_padded.1} parent=1 // pred_fallthru
      _
    // Predicated region
    $region6: #{mlp_forward_padded.1} parent=1 // pred_check
      _
    $region7: #{mlp_forward_padded.1} parent=1 // pred_check_branch
      %14 = sbr.rel (0) target = $region9
    $region8: #{mlp_forward_padded.1} parent=1 // pred_region
      _
    $region9: #{mlp_forward_padded.1} parent=1 // pred_fallthru
      _
    // Predicated region
    $region10: #{mlp_forward_padded.1} parent=1 // pred_check
      _
    $region11: #{mlp_forward_padded.1} parent=1 // pred_check_branch
      %16 = sbr.rel (0) target = $region13
    $region12: #{mlp_forward_padded.1} parent=1 // pred_region
      _
    $region13: #{mlp_forward_padded.1} parent=1 // pred_fallthru
      _
    // Predicated region
    $region14: #{mlp_forward_padded.1} parent=1 // pred_check
      _
    $region15: #{mlp_forward_padded.1} parent=1 // pred_check_branch
      %18 = sbr.rel (0) target = $region17
    $region16: #{mlp_forward_padded.1} parent=1 // pred_region
      _
    $region17: #{mlp_forward_padded.1} parent=1 // pred_fallthru
      _
    // Predicated region
    $region18: #{mlp_forward_padded.1} parent=1 // pred_check
      _
    $region19: #{mlp_forward_padded.1} parent=1 // pred_check_branch
      %20 = sbr.rel (0) target = $region21
    $region20: #{mlp_forward_padded.1} parent=1 // pred_region
      _
    $region21: #{mlp_forward_padded.1} parent=1 // pred_fallthru
      _
    %v22 = vld [vmem:[%s0] sm:$0xff]
    %v23 = vld [vmem:[%s0 + $0x8] sm:$0xff]
    %v24 = vld [vmem:[%s0 + $0x10] sm:$0xff]
    %v25 = vld [vmem:[%s0 + $0x18] sm:$0xff]
    %v26 = vld [vmem:[%s0 + $0x20] sm:$0xff]
    %v27 = vld [vmem:[%s0 + $0x28] sm:$0xff]
    %v28 = vld [vmem:[%s0 + $0x30] sm:$0xff]
    %v29 = vld [vmem:[%s0 + $0x38] sm:$0xff]
    %v30 = vld [vmem:[%s0 + $0x40] sm:$0xff]
    %v31 = vld [vmem:[%s0 + $0x48] sm:$0xff]
    %v32 = vld [vmem:[%s0 + $0x50] sm:$0xff]
    %v33 = vld [vmem:[%s0 + $0x58] sm:$0xff]
    %v34 = vld [vmem:[%s0 + $0x60] sm:$0xff]
    %v35 = vld [vmem:[%s0 + $0x68] sm:$0xff]
    %v36 = vpack.c.bf16 %v29, %v22
    %v37 = vpack.c.bf16 %v30, %v23
    %v38 = vpack.c.bf16 %v31, %v24
    %v39 = vpack.c.bf16 %v32, %v25
    %v40 = vpack.c.bf16 %v33, %v26
    %v41 = vpack.c.bf16 %v34, %v27
    %v42 = vpack.c.bf16 %v35, %v28
    %v43 = vld [vmem:[%s1] sm:$0xf]
    %v44 = vld [vmem:[%s1 + $0x4] sm:$0xf]
    %v45 = vld [vmem:[%s1 + $0x8] sm:$0xf]
    %v46 = vld [vmem:[%s1 + $0xc] sm:$0xf]
    %v47 = vld [vmem:[%s1 + $0x10] sm:$0xf]
    %v48 = vld [vmem:[%s1 + $0x14] sm:$0xf]
    %v49 = vld [vmem:[%s1 + $0x18] sm:$0xf]
    %v50 = vld [vmem:[%s1 + $0x1c] sm:$0xf]
    %v51 = vld [vmem:[%s1 + $0x20] sm:$0xf]
    %v52 = vld [vmem:[%s1 + $0x24] sm:$0xf]
    %v53 = vld [vmem:[%s1 + $0x28] sm:$0xf]
    %v54 = vld [vmem:[%s1 + $0x2c] sm:$0xf]
    %v55 = vld [vmem:[%s1 + $0x30] sm:$0xf]
    %v56 = vld [vmem:[%s1 + $0x34] sm:$0xf]
    %v57 = vld [vmem:[%s1 + $0x38] sm:$0xf]
    %v58 = vld [vmem:[%s1 + $0x3c] sm:$0xf]
    %v59 = vld [vmem:[%s1 + $0x40] sm:$0xf]
    %v60 = vld [vmem:[%s1 + $0x44] sm:$0xf]
    %v61 = vld [vmem:[%s1 + $0x48] sm:$0xf]
    %v62 = vld [vmem:[%s1 + $0x4c] sm:$0xf]
    %v63 = vld [vmem:[%s1 + $0x50] sm:$0xf]
    %v64 = vld [vmem:[%s1 + $0x54] sm:$0xf]
    %v65 = vld [vmem:[%s1 + $0x58] sm:$0xf]
    %v66 = vld [vmem:[%s1 + $0x5c] sm:$0xf]
    %v67 = vld [vmem:[%s1 + $0x60] sm:$0xf]
    %v68 = vld [vmem:[%s1 + $0x64] sm:$0xf]
    %v69 = vld [vmem:[%s1 + $0x68] sm:$0xf]
    %v70 = vld [vmem:[%s1 + $0x6c] sm:$0xf]
    %v71 = vld [vmem:[%s1 + $0x70] sm:$0xf]
    %v72 = vld [vmem:[%s1 + $0x74] sm:$0xf]
    %v73 = vld [vmem:[%s1 + $0x78] sm:$0xf]
    %v74 = vld [vmem:[%s1 + $0x7c] sm:$0xf]
    %v75 = vld [vmem:[%s1 + $0x80] sm:$0xf]
    %v76 = vld [vmem:[%s1 + $0x84] sm:$0xf]
    %v77 = vld [vmem:[%s1 + $0x88] sm:$0xf]
    %v78 = vld [vmem:[%s1 + $0x8c] sm:$0xf]
    %v79 = vld [vmem:[%s1 + $0x90] sm:$0xf]
    %v80 = vld [vmem:[%s1 + $0x94] sm:$0xf]
    %v81 = vld [vmem:[%s1 + $0x98] sm:$0xf]
    %v82 = vld [vmem:[%s1 + $0x9c] sm:$0xf]
    %v83 = vld [vmem:[%s1 + $0xa0] sm:$0xf]
    %v84 = vld [vmem:[%s1 + $0xa4] sm:$0xf]
    %v85 = vld [vmem:[%s1 + $0xa8] sm:$0xf]
    %v86 = vld [vmem:[%s1 + $0xac] sm:$0xf]
    %v87 = vld [vmem:[%s1 + $0xb0] sm:$0xf]
    %v88 = vld [vmem:[%s1 + $0xb4] sm:$0xf]
    %v89 = vld [vmem:[%s1 + $0xb8] sm:$0xf]
    %v90 = vld [vmem:[%s1 + $0xbc] sm:$0xf]
    %v91 = vld [vmem:[%s1 + $0xc0] sm:$0xf]
    %v92 = vld [vmem:[%s1 + $0xc4] sm:$0xf]
    %v93 = vld [vmem:[%s1 + $0xc8] sm:$0xf]
    %v94 = vld [vmem:[%s1 + $0xcc] sm:$0xf]
    %v95 = vld [vmem:[%s1 + $0xd0] sm:$0xf]
    %v96 = vld [vmem:[%s1 + $0xd4] sm:$0xf]
    %v97 = vld [vmem:[%s1 + $0xd8] sm:$0xf]
    %v98 = vld [vmem:[%s1 + $0xdc] sm:$0xf]
    %v99 = vld [vmem:[%s1 + $0xe0] sm:$0xf]
    %v100 = vld [vmem:[%s1 + $0xe4] sm:$0xf]
    %v101 = vld [vmem:[%s1 + $0xe8] sm:$0xf]
    %v102 = vld [vmem:[%s1 + $0xec] sm:$0xf]
    %v103 = vld [vmem:[%s1 + $0xf0] sm:$0xf]
    %v104 = vld [vmem:[%s1 + $0xf4] sm:$0xf]
    %v105 = vld [vmem:[%s1 + $0xf8] sm:$0xf]
    %v106 = vld [vmem:[%s1 + $0xfc] sm:$0xf]
    %v107 = vld [vmem:[%s1 + $0x100] sm:$0xf]
    %v108 = vld [vmem:[%s1 + $0x104] sm:$0xf]
    %v109 = vld [vmem:[%s1 + $0x108] sm:$0xf]
    %v110 = vld [vmem:[%s1 + $0x10c] sm:$0xf]
    %v111 = vld [vmem:[%s1 + $0x110] sm:$0xf]
    %v112 = vld [vmem:[%s1 + $0x114] sm:$0xf]
    %v113 = vld [vmem:[%s1 + $0x118] sm:$0xf]
    %v114 = vld [vmem:[%s1 + $0x11c] sm:$0xf]
    %v115 = vld [vmem:[%s1 + $0x120] sm:$0xf]
    %v116 = vld [vmem:[%s1 + $0x124] sm:$0xf]
    %v117 = vld [vmem:[%s1 + $0x128] sm:$0xf]
    %v118 = vld [vmem:[%s1 + $0x12c] sm:$0xf]
    %v119 = vld [vmem:[%s1 + $0x130] sm:$0xf]
    %v120 = vld [vmem:[%s1 + $0x134] sm:$0xf]
    %v121 = vld [vmem:[%s1 + $0x138] sm:$0xf]
    %v122 = vld [vmem:[%s1 + $0x13c] sm:$0xf]
    %v123 = vld [vmem:[%s1 + $0x140] sm:$0xf]
    %v124 = vld [vmem:[%s1 + $0x144] sm:$0xf]
    %v125 = vld [vmem:[%s1 + $0x148] sm:$0xf]
    %v126 = vld [vmem:[%s1 + $0x14c] sm:$0xf]
    %v127 = vld [vmem:[%s1 + $0x150] sm:$0xf]
    %v128 = vld [vmem:[%s1 + $0x154] sm:$0xf]
    %v129 = vld [vmem:[%s1 + $0x158] sm:$0xf]
    %v130 = vld [vmem:[%s1 + $0x15c] sm:$0xf]
    %v131 = vld [vmem:[%s1 + $0x160] sm:$0xf]
    %v132 = vld [vmem:[%s1 + $0x164] sm:$0xf]
    %v133 = vld [vmem:[%s1 + $0x168] sm:$0xf]
    %v134 = vld [vmem:[%s1 + $0x16c] sm:$0xf]
    %v135 = vld [vmem:[%s1 + $0x170] sm:$0xf]
    %v136 = vld [vmem:[%s1 + $0x174] sm:$0xf]
    %v137 = vld [vmem:[%s1 + $0x178] sm:$0xf]
    %v138 = vld [vmem:[%s1 + $0x17c] sm:$0xf]
    %v139 = vld [vmem:[%s1 + $0x180] sm:$0xf]
    %v140 = vld [vmem:[%s1 + $0x184] sm:$0xf]
    %v141 = vld [vmem:[%s2] sm:$0x1]
    %v143 = vperm.slane %v141, 0
    %v243 = vunpack.c.l.b16 %v43
    %v244 = vunpack.c.l.b16 %v44
    %v245 = vunpack.c.l.b16 %v45
    %v246 = vunpack.c.l.b16 %v46
    %v247 = vunpack.c.l.b16 %v47
    %v248 = vunpack.c.l.b16 %v48
    %v249 = vunpack.c.l.b16 %v49
    %v250 = vunpack.c.l.b16 %v50
    %v251 = vunpack.c.l.b16 %v51
    %v252 = vunpack.c.l.b16 %v52
    %v253 = vunpack.c.l.b16 %v53
    %v254 = vunpack.c.l.b16 %v54
    %v255 = vunpack.c.l.b16 %v55
    %v256 = vunpack.c.l.b16 %v56
    %v257 = vunpack.c.l.b16 %v57
    %v258 = vunpack.c.l.b16 %v58
    %v259 = vunpack.c.l.b16 %v59
    %v260 = vunpack.c.l.b16 %v60
    %v261 = vunpack.c.l.b16 %v61
    %v262 = vunpack.c.l.b16 %v62
    %v263 = vunpack.c.l.b16 %v63
    %v264 = vunpack.c.l.b16 %v64
    %v265 = vunpack.c.l.b16 %v65
    %v266 = vunpack.c.l.b16 %v66
    %v267 = vunpack.c.l.b16 %v67
    %v268 = vunpack.c.l.b16 %v68
    %v269 = vunpack.c.l.b16 %v69
    %v270 = vunpack.c.l.b16 %v70
    %v271 = vunpack.c.l.b16 %v71
    %v272 = vunpack.c.l.b16 %v72
    %v273 = vunpack.c.l.b16 %v73
    %v274 = vunpack.c.l.b16 %v74
    %v275 = vunpack.c.l.b16 %v75
    %v276 = vunpack.c.l.b16 %v76
    %v277 = vunpack.c.l.b16 %v77
    %v278 = vunpack.c.l.b16 %v78
    %v279 = vunpack.c.l.b16 %v79
    %v280 = vunpack.c.l.b16 %v80
    %v281 = vunpack.c.l.b16 %v81
    %v282 = vunpack.c.l.b16 %v82
    %v283 = vunpack.c.l.b16 %v83
    %v284 = vunpack.c.l.b16 %v84
    %v285 = vunpack.c.l.b16 %v85
    %v286 = vunpack.c.l.b16 %v86
    %v287 = vunpack.c.l.b16 %v87
    %v288 = vunpack.c.l.b16 %v88
    %v289 = vunpack.c.l.b16 %v89
    %v290 = vunpack.c.l.b16 %v90
    %v291 = vunpack.c.l.b16 %v91
    %v292 = vunpack.c.l.b16 %v92
    %v293 = vunpack.c.l.b16 %v93
    %v294 = vunpack.c.l.b16 %v94
    %v295 = vunpack.c.l.b16 %v95
    %v296 = vunpack.c.l.b16 %v96
    %v297 = vunpack.c.l.b16 %v97
    %v298 = vunpack.c.l.b16 %v98
    %v299 = vunpack.c.l.b16 %v99
    %v300 = vunpack.c.l.b16 %v100
    %v301 = vunpack.c.l.b16 %v101
    %v302 = vunpack.c.l.b16 %v102
    %v303 = vunpack.c.l.b16 %v103
    %v304 = vunpack.c.l.b16 %v104
    %v305 = vunpack.c.l.b16 %v105
    %v306 = vunpack.c.l.b16 %v106
    %v307 = vunpack.c.l.b16 %v107
    %v308 = vunpack.c.l.b16 %v108
    %v309 = vunpack.c.l.b16 %v109
    %v310 = vunpack.c.l.b16 %v110
    %v311 = vunpack.c.l.b16 %v111
    %v312 = vunpack.c.l.b16 %v112
    %v313 = vunpack.c.l.b16 %v113
    %v314 = vunpack.c.l.b16 %v114
    %v315 = vunpack.c.l.b16 %v115
    %v316 = vunpack.c.l.b16 %v116
    %v317 = vunpack.c.l.b16 %v117
    %v318 = vunpack.c.l.b16 %v118
    %v319 = vunpack.c.l.b16 %v119
    %v320 = vunpack.c.l.b16 %v120
    %v321 = vunpack.c.l.b16 %v121
    %v322 = vunpack.c.l.b16 %v122
    %v323 = vunpack.c.l.b16 %v123
    %v324 = vunpack.c.l.b16 %v124
    %v325 = vunpack.c.l.b16 %v125
    %v326 = vunpack.c.l.b16 %v126
    %v327 = vunpack.c.l.b16 %v127
    %v328 = vunpack.c.l.b16 %v128
    %v329 = vunpack.c.l.b16 %v129
    %v330 = vunpack.c.l.b16 %v130
    %v331 = vunpack.c.l.b16 %v131
    %v332 = vunpack.c.l.b16 %v132
    %v333 = vunpack.c.l.b16 %v133
    %v334 = vunpack.c.l.b16 %v134
    %v335 = vunpack.c.l.b16 %v135
    %v336 = vunpack.c.l.b16 %v136
    %v337 = vunpack.c.l.b16 %v137
    %v338 = vunpack.c.l.b16 %v138
    %v339 = vunpack.c.l.b16 %v139
    %v340 = vunpack.c.l.b16 %v140
    %v341 = vpack.c.b16 %v244, %v243
    %v342 = vpack.c.b16 %v246, %v245
    %v343 = vpack.c.b16 %v248, %v247
    %v344 = vpack.c.b16 %v250, %v249
    %v345 = vpack.c.b16 %v252, %v251
    %v346 = vpack.c.b16 %v254, %v253
    %v347 = vpack.c.b16 %v256, %v255
    %v348 = vpack.c.b16 %v258, %v257
    %v349 = vpack.c.b16 %v260, %v259
    %v350 = vpack.c.b16 %v262, %v261
    %v351 = vpack.c.b16 %v264, %v263
    %v352 = vpack.c.b16 %v266, %v265
    %v353 = vpack.c.b16 %v268, %v267
    %v354 = vpack.c.b16 %v270, %v269
    %v355 = vpack.c.b16 %v272, %v271
    %v356 = vpack.c.b16 %v274, %v273
    %v357 = vpack.c.b16 %v276, %v275
    %v358 = vpack.c.b16 %v278, %v277
    %v359 = vpack.c.b16 %v280, %v279
    %v360 = vpack.c.b16 %v282, %v281
    %v361 = vpack.c.b16 %v284, %v283
    %v362 = vpack.c.b16 %v286, %v285
    %v363 = vpack.c.b16 %v288, %v287
    %v364 = vpack.c.b16 %v290, %v289
    %v365 = vpack.c.b16 %v292, %v291
    %v366 = vpack.c.b16 %v294, %v293
    %v367 = vpack.c.b16 %v296, %v295
    %v368 = vpack.c.b16 %v298, %v297
    %v369 = vpack.c.b16 %v300, %v299
    %v370 = vpack.c.b16 %v302, %v301
    %v371 = vpack.c.b16 %v304, %v303
    %v372 = vpack.c.b16 %v306, %v305
    %v373 = vpack.c.b16 %v308, %v307
    %v374 = vpack.c.b16 %v310, %v309
    %v375 = vpack.c.b16 %v312, %v311
    %v376 = vpack.c.b16 %v314, %v313
    %v377 = vpack.c.b16 %v316, %v315
    %v378 = vpack.c.b16 %v318, %v317
    %v379 = vpack.c.b16 %v320, %v319
    %v380 = vpack.c.b16 %v322, %v321
    %v381 = vpack.c.b16 %v324, %v323
    %v382 = vpack.c.b16 %v326, %v325
    %v383 = vpack.c.b16 %v328, %v327
    %v384 = vpack.c.b16 %v330, %v329
    %v385 = vpack.c.b16 %v332, %v331
    %v386 = vpack.c.b16 %v334, %v333
    %v387 = vpack.c.b16 %v336, %v335
    %v388 = vpack.c.b16 %v338, %v337
    %v389 = vpack.c.b16 %v340, %v339
    %vm439 = vcmask 130048
    %v441 = vsel %vm439, %v42, 0
    %443 = vmatpush.bf16.msra.mxu0 %v348
    %444 = vmatpush.bf16.msra.mxu0 %v347
    %445 = vmatpush.bf16.msra.mxu0 %v346
    %446 = vmatpush.bf16.msra.mxu0 %v345
    %447 = vmatpush.bf16.msra.mxu0 %v344
    %448 = vmatpush.bf16.msra.mxu0 %v343
    %449 = vmatpush.bf16.msra.mxu0 %v342
    %450 = vmatpush.bf16.msra.mxu0 %v341
    %451 = vmatmul.bf16.gmra.mxu0 %v36
    %v452 = vpop.f32.mrf.mxu0
    %v453 = vadd.f32 %v143, %v452
    %v454 = vpop.f32.mrf.mxu0
    %v455 = vadd.f32 %v143, %v454
    %456 = vdwg.mxu0
    %457 = vmatpush.bf16.msra.mxu0 %v356
    %458 = vmatpush.bf16.msra.mxu0 %v355
    %459 = vmatpush.bf16.msra.mxu0 %v354
    %460 = vmatpush.bf16.msra.mxu0 %v353
    %461 = vmatpush.bf16.msra.mxu0 %v352
    %462 = vmatpush.bf16.msra.mxu0 %v351
    %463 = vmatpush.bf16.msra.mxu0 %v350
    %464 = vmatpush.bf16.msra.mxu0 %v349
    %465 = vmatmul.bf16.gmra.mxu0 %v37
    %v466 = vpop.f32.mrf.mxu0
    %v467 = vadd.f32 %v453, %v466
    %v468 = vpop.f32.mrf.mxu0
    %v469 = vadd.f32 %v455, %v468
    %470 = vdwg.mxu0
    %471 = vmatpush.bf16.msra.mxu0 %v364
    %472 = vmatpush.bf16.msra.mxu0 %v363
    %473 = vmatpush.bf16.msra.mxu0 %v362
    %474 = vmatpush.bf16.msra.mxu0 %v361
    %475 = vmatpush.bf16.msra.mxu0 %v360
    %476 = vmatpush.bf16.msra.mxu0 %v359
    %477 = vmatpush.bf16.msra.mxu0 %v358
    %478 = vmatpush.bf16.msra.mxu0 %v357
    %479 = vmatmul.bf16.gmra.mxu0 %v38
    %v480 = vpop.f32.mrf.mxu0
    %v481 = vadd.f32 %v467, %v480
    %v482 = vpop.f32.mrf.mxu0
    %v483 = vadd.f32 %v469, %v482
    %484 = vdwg.mxu0
    %485 = vmatpush.bf16.msra.mxu0 %v372
    %486 = vmatpush.bf16.msra.mxu0 %v371
    %487 = vmatpush.bf16.msra.mxu0 %v370
    %488 = vmatpush.bf16.msra.mxu0 %v369
    %489 = vmatpush.bf16.msra.mxu0 %v368
    %490 = vmatpush.bf16.msra.mxu0 %v367
    %491 = vmatpush.bf16.msra.mxu0 %v366
    %492 = vmatpush.bf16.msra.mxu0 %v365
    %493 = vmatmul.bf16.gmra.mxu0 %v39
    %v494 = vpop.f32.mrf.mxu0
    %v495 = vadd.f32 %v481, %v494
    %v496 = vpop.f32.mrf.mxu0
    %v497 = vadd.f32 %v483, %v496
    %498 = vdwg.mxu0
    %499 = vmatpush.bf16.msra.mxu0 %v380
    %500 = vmatpush.bf16.msra.mxu0 %v379
    %501 = vmatpush.bf16.msra.mxu0 %v378
    %502 = vmatpush.bf16.msra.mxu0 %v377
    %503 = vmatpush.bf16.msra.mxu0 %v376
    %504 = vmatpush.bf16.msra.mxu0 %v375
    %505 = vmatpush.bf16.msra.mxu0 %v374
    %506 = vmatpush.bf16.msra.mxu0 %v373
    %507 = vmatmul.bf16.gmra.mxu0 %v40
    %v508 = vpop.f32.mrf.mxu0
    %v509 = vadd.f32 %v495, %v508
    %v510 = vpop.f32.mrf.mxu0
    %v511 = vadd.f32 %v497, %v510
    %512 = vdwg.mxu0
    %513 = vmatpush.bf16.msra.mxu0 %v388
    %514 = vmatpush.bf16.msra.mxu0 %v387
    %515 = vmatpush.bf16.msra.mxu0 %v386
    %516 = vmatpush.bf16.msra.mxu0 %v385
    %517 = vmatpush.bf16.msra.mxu0 %v384
    %518 = vmatpush.bf16.msra.mxu0 %v383
    %519 = vmatpush.bf16.msra.mxu0 %v382
    %520 = vmatpush.bf16.msra.mxu0 %v381
    %521 = vmatmul.bf16.gmra.mxu0 %v41
    %v522 = vpop.f32.mrf.mxu0
    %v523 = vadd.f32 %v509, %v522
    %v524 = vpop.f32.mrf.mxu0
    %v525 = vadd.f32 %v511, %v524
    %526 = vdwg.mxu0
    %527 = vmatpush.bf16.msra.mxu0 0
    %528 = vmatpush.bf16.msra.mxu0 0
    %529 = vmatpush.bf16.msra.mxu0 0
    %530 = vmatpush.bf16.msra.mxu0 0
    %531 = vmatpush.bf16.msra.mxu0 0
    %532 = vmatpush.bf16.msra.mxu0 0
    %533 = vmatpush.bf16.msra.mxu0 0
    %534 = vmatpush.bf16.msra.mxu0 %v389
    %535 = vmatmul.bf16.gmra.mxu0 %v441
    %v536 = vpop.f32.mrf.mxu0
    %v537 = vadd.f32 %v523, %v536
    %v538 = vpop.f32.mrf.mxu0
    %v539 = vadd.f32 %v525, %v538
    %540 = vdwg.mxu0
    %v541 = vmax.f32 %v537, 0.0
    %v542 = vmax.f32 %v539, 0.0
    %v543 = vpack.c.bf16 %v542, %v541
    %v544 = vld [vmem:[%s3] sm:$0xf]
    %v545 = vld [vmem:[%s3 + $0x4] sm:$0xf]
    %v546 = vld [vmem:[%s3 + $0x8] sm:$0xf]
    %v547 = vld [vmem:[%s3 + $0xc] sm:$0xf]
    %v548 = vld [vmem:[%s3 + $0x10] sm:$0xf]
    %v549 = vld [vmem:[%s3 + $0x14] sm:$0xf]
    %v550 = vld [vmem:[%s3 + $0x18] sm:$0xf]
    %v551 = vld [vmem:[%s3 + $0x1c] sm:$0xf]
    %v552 = vld [vmem:[%s3 + $0x20] sm:$0xf]
    %v553 = vld [vmem:[%s3 + $0x24] sm:$0xf]
    %v554 = vld [vmem:[%s3 + $0x28] sm:$0xf]
    %v555 = vld [vmem:[%s3 + $0x2c] sm:$0xf]
    %v556 = vld [vmem:[%s3 + $0x30] sm:$0xf]
    %v557 = vld [vmem:[%s3 + $0x34] sm:$0xf]
    %v558 = vld [vmem:[%s3 + $0x38] sm:$0xf]
    %v559 = vld [vmem:[%s3 + $0x3c] sm:$0xf]
    %v560 = vld [vmem:[%s4] sm:$0x1]
    %v562 = vperm.slane %v560, 0
    %v580 = vunpack.c.l.b16 %v544
    %v581 = vunpack.c.l.b16 %v545
    %v582 = vunpack.c.l.b16 %v546
    %v583 = vunpack.c.l.b16 %v547
    %v584 = vunpack.c.l.b16 %v548
    %v585 = vunpack.c.l.b16 %v549
    %v586 = vunpack.c.l.b16 %v550
    %v587 = vunpack.c.l.b16 %v551
    %v588 = vunpack.c.l.b16 %v552
    %v589 = vunpack.c.l.b16 %v553
    %v590 = vunpack.c.l.b16 %v554
    %v591 = vunpack.c.l.b16 %v555
    %v592 = vunpack.c.l.b16 %v556
    %v593 = vunpack.c.l.b16 %v557
    %v594 = vunpack.c.l.b16 %v558
    %v595 = vunpack.c.l.b16 %v559
    %v596 = vpack.c.b16 %v581, %v580
    %v597 = vpack.c.b16 %v583, %v582
    %v598 = vpack.c.b16 %v585, %v584
    %v599 = vpack.c.b16 %v587, %v586
    %v600 = vpack.c.b16 %v589, %v588
    %v601 = vpack.c.b16 %v591, %v590
    %v602 = vpack.c.b16 %v593, %v592
    %v603 = vpack.c.b16 %v595, %v594
    %612 = vmatpush.bf16.msra.mxu0 %v603
    %613 = vmatpush.bf16.msra.mxu0 %v602
    %614 = vmatpush.bf16.msra.mxu0 %v601
    %615 = vmatpush.bf16.msra.mxu0 %v600
    %616 = vmatpush.bf16.msra.mxu0 %v599
    %617 = vmatpush.bf16.msra.mxu0 %v598
    %618 = vmatpush.bf16.msra.mxu0 %v597
    %619 = vmatpush.bf16.msra.mxu0 %v596
    %620 = vmatmul.bf16.gmra.mxu0 %v543
    %v621 = vpop.f32.mrf.mxu0
    %v622 = vadd.f32 %v562, %v621
    %v623 = vpop.f32.mrf.mxu0
    %v624 = vadd.f32 %v562, %v623
    %625 = vdwg.mxu0
    %v626 = vpack.c.bf16 %v622, %v622
    %v627 = vpack.c.bf16 %v624, %v624
    %628 = vst [vmem:[#allocation2] sm:$0xf] %v626
    %629 = vst [vmem:[#allocation2 + $0x4] sm:$0xf] %v627
    // Predicated region
    $region22: #{mlp_forward_padded.1} parent=1 // pred_check
      _
    $region23: #{mlp_forward_padded.1} parent=1 // pred_check_branch
      %631 = sbr.rel (0) target = $region25
    $region24: #{mlp_forward_padded.1} parent=1 // pred_region
      %633 = vsyncadd [#allocation3], 0
      %s634 = sshll.u32 [#allocation2], 4
      %s635 = int_to_ptr.vmem [resolvable:$true] %s634
      %s636 = sshll.u32 %s5, 4
      %s637 = int_to_ptr.hbm [resolvable:$true] %s636
      %642 = dma.vmem_to_hbm [thread:$0]  %s635, 128, %s637, [#allocation3], 64, 64, 4
    $region25: #{mlp_forward_padded.1} parent=1 // pred_fallthru
      _
    // Predicated region
    $region26: #{mlp_forward_padded.1} parent=1 // pred_check
      _
    $region27: #{mlp_forward_padded.1} parent=1 // pred_check_branch
      %644 = sbr.rel (0) target = $region29
    $region28: #{mlp_forward_padded.1} parent=1 // pred_region
      %646 = dma.done [#allocation3], 128
    $region29: #{mlp_forward_padded.1} parent=1 // pred_fallthru
      _
    %647 = vsyncpa [#allocation3], 1

</llo_original>
